<compile_context>
chip_gen: v5e
topology: v5e:2x2
jax: 0.10.0
libtpu: 0.0.40
codegen_flags: <defaults>
</compile_context>

<pallas_src>
import jax
import jax.numpy as jnp
from jax.experimental import pallas as pl
from jax.experimental.pallas import tpu as pltpu


def _round_up(x, m):
    return ((x + m - 1) // m) * m


def _mlp_kernel(x_ref, w1_ref, b1_ref, w2_ref, b2_ref, w3_ref, b3_ref, o_ref):
    # Layer 1: bf16 MXU inputs, f32 accumulation, f32 bias add.
    h1 = jnp.dot(x_ref[...], w1_ref[...],
                 preferred_element_type=jnp.float32) + b1_ref[...]
    # Dropout (eval mode) == identity.
    h2 = jnp.dot(h1.astype(jnp.bfloat16), w2_ref[...],
                 preferred_element_type=jnp.float32) + b2_ref[...]
    # Dropout (eval mode) == identity.
    out = jnp.dot(h2.astype(jnp.bfloat16), w3_ref[...],
                  preferred_element_type=jnp.float32) + b3_ref[...]
    o_ref[...] = out.astype(o_ref.dtype)


def vehicle_ffn(x, params, *, tb_max=512):
    """x: [B, in_c] float32.  params: dict of w1,b1,w2,b2,w3,b3 (w: [in,out])."""
    B, in_c = x.shape
    out_c = params["w3"].shape[1]

    K = _round_up(in_c, 128)          # MXU/lane-aligned contraction dim
    N = _round_up(out_c, 128)         # lane-dense output (no masked vst)
    TB = min(tb_max, _round_up(B, 16))
    Bp = _round_up(B, TB)

    # Zero-pad + cast MXU operands to bf16 (f32 accumulation in the kernel).
    xp = jnp.zeros((Bp, K), jnp.bfloat16).at[:B, :in_c].set(
        x.astype(jnp.bfloat16))
    w1 = jnp.zeros((K, 256), jnp.bfloat16).at[:in_c, :].set(
        params["w1"].astype(jnp.bfloat16))
    w2 = params["w2"].astype(jnp.bfloat16)
    w3 = jnp.zeros((512, N), jnp.bfloat16).at[:, :out_c].set(
        params["w3"].astype(jnp.bfloat16))
    b1 = params["b1"].astype(jnp.float32)
    b2 = params["b2"].astype(jnp.float32)
    b3 = jnp.zeros((1, N), jnp.float32).at[:, :out_c].set(
        params["b3"].astype(jnp.float32))

    # Weights/biases: full-array blocks with constant index maps -> stay
    # VMEM-resident across batch steps (no re-DMA).
    const = lambda a: pl.BlockSpec(a.shape, lambda i: (0,) * a.ndim)

    out = pl.pallas_call(
        _mlp_kernel,
        out_shape=jax.ShapeDtypeStruct((Bp, N), jnp.float32),
        grid=(Bp // TB,),
        in_specs=[
            pl.BlockSpec((TB, K), lambda i: (i, 0)),   # x: tiled over batch
            const(w1), const(b1),
            const(w2), const(b2),
            const(w3), const(b3),
        ],
        out_specs=pl.BlockSpec((TB, N), lambda i: (i, 0)),
        compiler_params=pltpu.CompilerParams(
            dimension_semantics=("parallel",)),
    )(xp, w1, b1, w2, b2, w3, b3)

    return out[:B, :out_c].astype(x.dtype)


def init_params(key, in_c, out_c, dtype=jnp.float32):
    """Deterministic init mirroring nn.Linear's uniform(-1/sqrt(fan_in), ...)."""
    ks = jax.random.split(key, 6)
    dims = [(in_c, 256), (256, 512), (512, out_c)]
    params = {}
    for i, (fi, fo) in enumerate(dims, start=1):
        bound = 1.0 / (fi ** 0.5)
        params[f"w{i}"] = jax.random.uniform(ks[2 * i - 2], (fi, fo),
                                             dtype, -bound, bound)
        params[f"b{i}"] = jax.random.uniform(ks[2 * i - 1], (1, fo),
                                             dtype, -bound, bound)
    return params


def reference_ffn(x, p):
    # Mirrors the kernel's numerics: bf16 matmul inputs, f32 accumulation,
    # f32 bias adds (dropout = identity in eval mode).
    f = lambda a: a.astype(jnp.bfloat16).astype(jnp.float32)
    h1 = f(x) @ f(p["w1"]) + p["b1"]
    h2 = f(h1) @ f(p["w2"]) + p["b2"]
    return f(h2) @ f(p["w3"]) + p["b3"]


if __name__ == "__main__":
    key = jax.random.PRNGKey(0)
    k_x, k_p = jax.random.split(key)

    B, in_c, out_c = 8, 32, 64
    x = jax.random.normal(k_x, (B, in_c), dtype=jnp.float32)
    params = init_params(k_p, in_c, out_c)

    out = jax.block_until_ready(vehicle_ffn(x, params))
    ref = reference_ffn(x, params)

    assert out.shape == (B, out_c)
    max_err = float(jnp.max(jnp.abs(out - ref)))
    assert jnp.allclose(out, ref, atol=1e-2, rtol=1e-2), (
        f"mismatch vs reference (max abs err {max_err})")

    print("KERNEL_OK")
</pallas_src>

<mosaic_0001>
module attributes {stable_mosaic.version = 11 : i64} {
  func.func @_mlp_kernel(%arg0: i32, %arg1: memref<16x128xbf16, #tpu.memory_space<vmem>>, %arg2: memref<128x256xbf16, #tpu.memory_space<vmem>>, %arg3: memref<1x256xf32, #tpu.memory_space<vmem>>, %arg4: memref<256x512xbf16, #tpu.memory_space<vmem>>, %arg5: memref<1x512xf32, #tpu.memory_space<vmem>>, %arg6: memref<512x128xbf16, #tpu.memory_space<vmem>>, %arg7: memref<1x128xf32, #tpu.memory_space<vmem>>, %arg8: memref<16x128xf32, #tpu.memory_space<vmem>>) attributes {dimension_semantics = [#tpu.dimension_semantics<parallel>], iteration_bounds = array<i64: 1>, scalar_prefetch = 0 : i64, scratch_operands = 0 : i64, tpu.core_type = #tpu.core_type<tc>, window_params = [{transform_indices = @transform_0, window_bounds = array<i64: 16, 128>}, {pipeline_mode = #tpu.pipeline_mode<synchronous>, transform_indices = @transform_1, window_bounds = array<i64: 128, 256>}, {pipeline_mode = #tpu.pipeline_mode<synchronous>, transform_indices = @transform_2, window_bounds = array<i64: 1, 256>}, {pipeline_mode = #tpu.pipeline_mode<synchronous>, transform_indices = @transform_3, window_bounds = array<i64: 256, 512>}, {pipeline_mode = #tpu.pipeline_mode<synchronous>, transform_indices = @transform_4, window_bounds = array<i64: 1, 512>}, {pipeline_mode = #tpu.pipeline_mode<synchronous>, transform_indices = @transform_5, window_bounds = array<i64: 512, 128>}, {pipeline_mode = #tpu.pipeline_mode<synchronous>, transform_indices = @transform_6, window_bounds = array<i64: 1, 128>}, {transform_indices = @transform_7, window_bounds = array<i64: 16, 128>}]} {
    %c0 = arith.constant 0 : index
    %c0_0 = arith.constant 0 : index
    %0 = vector.load %arg1[%c0, %c0_0] : memref<16x128xbf16, #tpu.memory_space<vmem>>, vector<16x128xbf16>
    %c0_1 = arith.constant 0 : index
    %c0_2 = arith.constant 0 : index
    %1 = vector.load %arg2[%c0_1, %c0_2] : memref<128x256xbf16, #tpu.memory_space<vmem>>, vector<128x256xbf16>
    %cst = arith.constant dense<0.000000e+00> : vector<16x256xf32>
    %2 = tpu.matmul %0, %1, %cst {dimension_numbers = #tpu.dot_dimension_numbers<[1], [0], [0], [1], [0, 0, 1, 1], [], []>} : vector<16x128xbf16>, vector<128x256xbf16>, vector<16x256xf32> -> vector<16x256xf32>
    %c0_3 = arith.constant 0 : index
    %c0_4 = arith.constant 0 : index
    %3 = vector.load %arg3[%c0_3, %c0_4] : memref<1x256xf32, #tpu.memory_space<vmem>>, vector<1x256xf32>
    %4 = vector.broadcast %3 : vector<1x256xf32> to vector<16x256xf32>
    %5 = arith.addf %2, %4 : vector<16x256xf32>
    %6 = arith.truncf %5 : vector<16x256xf32> to vector<16x256xbf16>
    %c0_5 = arith.constant 0 : index
    %c0_6 = arith.constant 0 : index
    %7 = vector.load %arg4[%c0_5, %c0_6] : memref<256x512xbf16, #tpu.memory_space<vmem>>, vector<256x512xbf16>
    %cst_7 = arith.constant dense<0.000000e+00> : vector<16x512xf32>
    %8 = tpu.matmul %6, %7, %cst_7 {dimension_numbers = #tpu.dot_dimension_numbers<[1], [0], [0], [1], [0, 0, 1, 1], [], []>} : vector<16x256xbf16>, vector<256x512xbf16>, vector<16x512xf32> -> vector<16x512xf32>
    %c0_8 = arith.constant 0 : index
    %c0_9 = arith.constant 0 : index
    %9 = vector.load %arg5[%c0_8, %c0_9] : memref<1x512xf32, #tpu.memory_space<vmem>>, vector<1x512xf32>
    %10 = vector.broadcast %9 : vector<1x512xf32> to vector<16x512xf32>
    %11 = arith.addf %8, %10 : vector<16x512xf32>
    %12 = arith.truncf %11 : vector<16x512xf32> to vector<16x512xbf16>
    %c0_10 = arith.constant 0 : index
    %c0_11 = arith.constant 0 : index
    %13 = vector.load %arg6[%c0_10, %c0_11] : memref<512x128xbf16, #tpu.memory_space<vmem>>, vector<512x128xbf16>
    %cst_12 = arith.constant dense<0.000000e+00> : vector<16x128xf32>
    %14 = tpu.matmul %12, %13, %cst_12 {dimension_numbers = #tpu.dot_dimension_numbers<[1], [0], [0], [1], [0, 0, 1, 1], [], []>} : vector<16x512xbf16>, vector<512x128xbf16>, vector<16x128xf32> -> vector<16x128xf32>
    %c0_13 = arith.constant 0 : index
    %c0_14 = arith.constant 0 : index
    %15 = vector.load %arg7[%c0_13, %c0_14] : memref<1x128xf32, #tpu.memory_space<vmem>>, vector<1x128xf32>
    %16 = vector.broadcast %15 : vector<1x128xf32> to vector<16x128xf32>
    %17 = arith.addf %14, %16 : vector<16x128xf32>
    %c0_15 = arith.constant 0 : index
    %c0_16 = arith.constant 0 : index
    %18 = vector.load %arg8[%c0_15, %c0_16] : memref<16x128xf32, #tpu.memory_space<vmem>>, vector<16x128xf32>
    tpu.vector_store %arg8[%c0_15, %c0_16], %17 {strides = array<i32>} : memref<16x128xf32, #tpu.memory_space<vmem>>, vector<16x128xf32>,
    return
  }
  func.func @transform_0(%arg0: i32) -> (i32, i32) {
    %c0_i32 = arith.constant 0 : i32
    %c0_i32_0 = arith.constant 0 : i32
    return %arg0, %c0_i32 : i32, i32
  }
  func.func @transform_1(%arg0: i32) -> (i32, i32) {
    %c0_i32 = arith.constant 0 : i32
    %c0_i32_0 = arith.constant 0 : i32
    %c0_i32_1 = arith.constant 0 : i32
    return %c0_i32, %c0_i32_0 : i32, i32
  }
  func.func @transform_2(%arg0: i32) -> (i32, i32) {
    %c0_i32 = arith.constant 0 : i32
    %c0_i32_0 = arith.constant 0 : i32
    %c0_i32_1 = arith.constant 0 : i32
    return %c0_i32, %c0_i32_0 : i32, i32
  }
  func.func @transform_3(%arg0: i32) -> (i32, i32) {
    %c0_i32 = arith.constant 0 : i32
    %c0_i32_0 = arith.constant 0 : i32
    %c0_i32_1 = arith.constant 0 : i32
    return %c0_i32, %c0_i32_0 : i32, i32
  }
  func.func @transform_4(%arg0: i32) -> (i32, i32) {
    %c0_i32 = arith.constant 0 : i32
    %c0_i32_0 = arith.constant 0 : i32
    %c0_i32_1 = arith.constant 0 : i32
    return %c0_i32, %c0_i32_0 : i32, i32
  }
  func.func @transform_5(%arg0: i32) -> (i32, i32) {
    %c0_i32 = arith.constant 0 : i32
    %c0_i32_0 = arith.constant 0 : i32
    %c0_i32_1 = arith.constant 0 : i32
    return %c0_i32, %c0_i32_0 : i32, i32
  }
  func.func @transform_6(%arg0: i32) -> (i32, i32) {
    %c0_i32 = arith.constant 0 : i32
    %c0_i32_0 = arith.constant 0 : i32
    %c0_i32_1 = arith.constant 0 : i32
    return %c0_i32, %c0_i32_0 : i32, i32
  }
  func.func @transform_7(%arg0: i32) -> (i32, i32) {
    %c0_i32 = arith.constant 0 : i32
    %c0_i32_0 = arith.constant 0 : i32
    return %arg0, %c0_i32 : i32, i32
  }
}

</mosaic_0001>

<llo_original>
// kernel: tpu_custom_call.1
$region0: #{tpu_custom_call.1}
  #allocation0 [shape = 'u32[]', space=smem, size = 0x4, offset = 0x4, fixed_abs, tag = 'smem constant byte address 0x4 - core index']
  #allocation1 [shape = 'u32[72,128]{1,0:T(1,128)}', space=vmem, size = 0x9000, scoped, tag = 'internal scratch']
  %s0 = inlined_call_operand.hbm [shape: bf16[16,128], index: 0, kind: input, shape index: {}]
  %s1 = inlined_call_operand.hbm [shape: bf16[128,256], index: 1, kind: input, shape index: {}]
  %s2 = inlined_call_operand.hbm [shape: f32[1,256], index: 2, kind: input, shape index: {}]
  %s3 = inlined_call_operand.hbm [shape: bf16[256,512], index: 3, kind: input, shape index: {}]
  %s4 = inlined_call_operand.hbm [shape: f32[1,512], index: 4, kind: input, shape index: {}]
  %s5 = inlined_call_operand.hbm [shape: bf16[512,128], index: 5, kind: input, shape index: {}]
  %s6 = inlined_call_operand.vmem [shape: f32[1,128], index: 6, kind: input, shape index: {}]
  %s7 = inlined_call_operand.hbm [shape: f32[16,128], index: 7, kind: output, shape index: {}]
  %s8 = sld [smem:[#allocation0]]
  $region62: #{tpu_custom_call.1} parent=0
    _
  %s10 = ssub.s32 1, %s8
  %s11 = scalar_select 0, %s10, %s8
  $region1: #{tpu_custom_call.1} parent=0
    #allocation2 [shape = 'u8[4096]{0}', space=vmem, size = 0x1000, scoped, tag = 'input window, operand 0, single buffered']
    #allocation3 [shape = 's32[1]{0}', space=sflag, size = 0x4, scoped, tag = 'scoped memory for tpu_custom_call.1']
    #allocation4 [shape = 's32[1]{0}', space=sflag, size = 0x4, scoped, tag = 'scoped memory for tpu_custom_call.1']
    #allocation5 [shape = 'u8[65536]{0}', space=vmem, size = 0x10000, scoped, tag = 'input window, operand 1, single buffered']
    #allocation6 [shape = 's32[1]{0}', space=sflag, size = 0x4, scoped, tag = 'scoped memory for tpu_custom_call.1']
    #allocation7 [shape = 'u8[1024]{0}', space=vmem, size = 0x400, scoped, tag = 'input window, operand 2, single buffered']
    #allocation8 [shape = 'u8[262144]{0}', space=vmem, size = 0x40000, scoped, tag = 'input window, operand 3, single buffered']
    #allocation9 [shape = 's32[1]{0}', space=sflag, size = 0x4, scoped, tag = 'scoped memory for tpu_custom_call.1']
    #allocation10 [shape = 'u8[2048]{0}', space=vmem, size = 0x800, scoped, tag = 'input window, operand 4, single buffered']
    #allocation11 [shape = 'u8[131072]{0}', space=vmem, size = 0x20000, scoped, tag = 'input window, operand 5, single buffered']
    #allocation12 [shape = 's32[1]{0}', space=sflag, size = 0x4, scoped, tag = 'scoped memory for tpu_custom_call.1']
    #allocation13 [shape = 'u8[8192]{0}', space=vmem, size = 0x2000, scoped, tag = 'output window, operand 0, single buffered']
    %12 = vsyncpa [#allocation3], 0
    %13 = vsyncpa [#allocation6], 0
    %14 = vsyncpa [#allocation9], 0
    %15 = vsyncpa [#allocation12], 0
    %16 = vsyncpa [#allocation4], 0
    // Predicated region
    $region2: #{tpu_custom_call.1} parent=1 // pred_check
      _
    $region3: #{tpu_custom_call.1} parent=1 // pred_check_branch
      %18 = sbr.rel (0) target = $region5
    $region4: #{tpu_custom_call.1} parent=1 // pred_region
      %20 = vsyncadd [#allocation3], 0
      %s21 = sshll.u32 %s0, 4
      %s22 = int_to_ptr.hbm [resolvable:$true] %s21
      %s23 = sshll.u32 [#allocation2], 4
      %s24 = int_to_ptr.vmem [resolvable:$true] %s23
      %29 = dma.hbm_to_vmem [thread:$0]  %s22, 128, %s24, [#allocation3], 64, 64, 4
    $region5: #{tpu_custom_call.1} parent=1 // pred_fallthru
      _
    // Predicated region
    $region6: #{tpu_custom_call.1} parent=1 // pred_check
      _
    $region7: #{tpu_custom_call.1} parent=1 // pred_check_branch
      %31 = sbr.rel (0) target = $region9
    $region8: #{tpu_custom_call.1} parent=1 // pred_region
      %33 = vsyncadd [#allocation6], 0
      %s34 = sshll.u32 %s1, 4
      %s35 = int_to_ptr.hbm [resolvable:$true] %s34
      %s36 = sshll.u32 [#allocation5], 4
      %s37 = int_to_ptr.vmem [resolvable:$true] %s36
      %42 = dma.hbm_to_vmem [thread:$0]  %s35, 2048, %s37, [#allocation6], 128, 128, 8
    $region9: #{tpu_custom_call.1} parent=1 // pred_fallthru
      _
    // Predicated region
    $region10: #{tpu_custom_call.1} parent=1 // pred_check
      _
    $region11: #{tpu_custom_call.1} parent=1 // pred_check_branch
      %44 = sbr.rel (0) target = $region13
    $region12: #{tpu_custom_call.1} parent=1 // pred_region
      %46 = vsyncadd [#allocation6], 0
      %s48 = sshll.u32 %s2, 4
      %s49 = int_to_ptr.hbm [resolvable:$true] %s48
      %s50 = sshll.u32 [#allocation7], 4
      %s51 = int_to_ptr.vmem [resolvable:$true] %s50
      %53 = dma.hbm_to_vmem [thread:$0]  %s49, 32, %s51, [#allocation6]
    $region13: #{tpu_custom_call.1} parent=1 // pred_fallthru
      _
    // Predicated region
    $region14: #{tpu_custom_call.1} parent=1 // pred_check
      _
    $region15: #{tpu_custom_call.1} parent=1 // pred_check_branch
      %55 = sbr.rel (0) target = $region17
    $region16: #{tpu_custom_call.1} parent=1 // pred_region
      %57 = vsyncadd [#allocation9], 0
      %s58 = sshll.u32 %s3, 4
      %s59 = int_to_ptr.hbm [resolvable:$true] %s58
      %s60 = sshll.u32 [#allocation8], 4
      %s61 = int_to_ptr.vmem [resolvable:$true] %s60
      %66 = dma.hbm_to_vmem [thread:$0]  %s59, 8192, %s61, [#allocation9], 256, 256, 16
    $region17: #{tpu_custom_call.1} parent=1 // pred_fallthru
      _
    // Predicated region
    $region18: #{tpu_custom_call.1} parent=1 // pred_check
      _
    $region19: #{tpu_custom_call.1} parent=1 // pred_check_branch
      %68 = sbr.rel (0) target = $region21
    $region20: #{tpu_custom_call.1} parent=1 // pred_region
      %70 = vsyncadd [#allocation9], 0
      %s72 = sshll.u32 %s4, 4
      %s73 = int_to_ptr.hbm [resolvable:$true] %s72
      %s74 = sshll.u32 [#allocation10], 4
      %s75 = int_to_ptr.vmem [resolvable:$true] %s74
      %77 = dma.hbm_to_vmem [thread:$0]  %s73, 64, %s75, [#allocation9]
    $region21: #{tpu_custom_call.1} parent=1 // pred_fallthru
      _
    // Predicated region
    $region22: #{tpu_custom_call.1} parent=1 // pred_check
      _
    $region23: #{tpu_custom_call.1} parent=1 // pred_check_branch
      %79 = sbr.rel (0) target = $region25
    $region24: #{tpu_custom_call.1} parent=1 // pred_region
      %81 = vsyncadd [#allocation12], 0
      %s82 = sshll.u32 %s5, 4
      %s83 = int_to_ptr.hbm [resolvable:$true] %s82
      %s84 = sshll.u32 [#allocation11], 4
      %s85 = int_to_ptr.vmem [resolvable:$true] %s84
      %90 = dma.hbm_to_vmem [thread:$0]  %s83, 4096, %s85, [#allocation12], 64, 64, 4
    $region25: #{tpu_custom_call.1} parent=1 // pred_fallthru
      _
    // Predicated region
    $region26: #{tpu_custom_call.1} parent=1 // pred_check
      _
    $region27: #{tpu_custom_call.1} parent=1 // pred_check_branch
      %92 = sbr.rel (0) target = $region29
    $region28: #{tpu_custom_call.1} parent=1 // pred_region
      _
    $region29: #{tpu_custom_call.1} parent=1 // pred_fallthru
      _
    // Predicated region
    $region30: #{tpu_custom_call.1} parent=1 // pred_check
      _
    $region31: #{tpu_custom_call.1} parent=1 // pred_check_branch
      %94 = sbr.rel (0) target = $region33
    $region32: #{tpu_custom_call.1} parent=1 // pred_region
      %96 = dma.done [#allocation3], 128
    $region33: #{tpu_custom_call.1} parent=1 // pred_fallthru
      _
    // Predicated region
    $region34: #{tpu_custom_call.1} parent=1 // pred_check
      _
    $region35: #{tpu_custom_call.1} parent=1 // pred_check_branch
      %98 = sbr.rel (0) target = $region37
    $region36: #{tpu_custom_call.1} parent=1 // pred_region
      %100 = dma.done [#allocation6], 2048
    $region37: #{tpu_custom_call.1} parent=1 // pred_fallthru
      _
    // Predicated region
    $region38: #{tpu_custom_call.1} parent=1 // pred_check
      _
    $region39: #{tpu_custom_call.1} parent=1 // pred_check_branch
      %102 = sbr.rel (0) target = $region41
    $region40: #{tpu_custom_call.1} parent=1 // pred_region
      %104 = dma.done [#allocation6], 32
    $region41: #{tpu_custom_call.1} parent=1 // pred_fallthru
      _
    // Predicated region
    $region42: #{tpu_custom_call.1} parent=1 // pred_check
      _
    $region43: #{tpu_custom_call.1} parent=1 // pred_check_branch
      %106 = sbr.rel (0) target = $region45
    $region44: #{tpu_custom_call.1} parent=1 // pred_region
      %108 = dma.done [#allocation9], 8192
    $region45: #{tpu_custom_call.1} parent=1 // pred_fallthru
      _
    // Predicated region
    $region46: #{tpu_custom_call.1} parent=1 // pred_check
      _
    $region47: #{tpu_custom_call.1} parent=1 // pred_check_branch
      %110 = sbr.rel (0) target = $region49
    $region48: #{tpu_custom_call.1} parent=1 // pred_region
      %112 = dma.done [#allocation9], 64
    $region49: #{tpu_custom_call.1} parent=1 // pred_fallthru
      _
    // Predicated region
    $region50: #{tpu_custom_call.1} parent=1 // pred_check
      _
    $region51: #{tpu_custom_call.1} parent=1 // pred_check_branch
      %114 = sbr.rel (0) target = $region53
    $region52: #{tpu_custom_call.1} parent=1 // pred_region
      %116 = dma.done [#allocation12], 4096
    $region53: #{tpu_custom_call.1} parent=1 // pred_fallthru
      _
    %v117 = vld [vmem:[#allocation2] sm:$0xf]
    %v118 = vld [vmem:[#allocation2 + $0x4] sm:$0xf]
    %v119 = vld [vmem:[#allocation5] sm:$0xff]
    %v120 = vld [vmem:[#allocation5 + $0x8] sm:$0xff]
    %v121 = vld [vmem:[#allocation5 + $0x10] sm:$0xff]
    %v122 = vld [vmem:[#allocation5 + $0x18] sm:$0xff]
    %v123 = vld [vmem:[#allocation5 + $0x20] sm:$0xff]
    %v124 = vld [vmem:[#allocation5 + $0x28] sm:$0xff]
    %v125 = vld [vmem:[#allocation5 + $0x30] sm:$0xff]
    %v126 = vld [vmem:[#allocation5 + $0x38] sm:$0xff]
    %v127 = vld [vmem:[#allocation5 + $0x40] sm:$0xff]
    %v128 = vld [vmem:[#allocation5 + $0x48] sm:$0xff]
    %v129 = vld [vmem:[#allocation5 + $0x50] sm:$0xff]
    %v130 = vld [vmem:[#allocation5 + $0x58] sm:$0xff]
    %v131 = vld [vmem:[#allocation5 + $0x60] sm:$0xff]
    %v132 = vld [vmem:[#allocation5 + $0x68] sm:$0xff]
    %v133 = vld [vmem:[#allocation5 + $0x70] sm:$0xff]
    %v134 = vld [vmem:[#allocation5 + $0x78] sm:$0xff]
    %v135 = vld [vmem:[#allocation7] sm:$0x3]
    %v137 = vperm.slane %v135, 0
    %v138 = vperm.slane %v135, 1
    %v143 = vunpack.c.l.b16 %v117
    %v144 = vunpack.c.l.b16 %v118
    %v145 = vpack.c.b16 %v144, %v143
    %v163 = vunpack.c.l.b16 %v119
    %v164 = vunpack.c.h.b16 %v119
    %v165 = vunpack.c.l.b16 %v120
    %v166 = vunpack.c.h.b16 %v120
    %v167 = vunpack.c.l.b16 %v121
    %v168 = vunpack.c.h.b16 %v121
    %v169 = vunpack.c.l.b16 %v122
    %v170 = vunpack.c.h.b16 %v122
    %v171 = vunpack.c.l.b16 %v123
    %v172 = vunpack.c.h.b16 %v123
    %v173 = vunpack.c.l.b16 %v124
    %v174 = vunpack.c.h.b16 %v124
    %v175 = vunpack.c.l.b16 %v125
    %v176 = vunpack.c.h.b16 %v125
    %v177 = vunpack.c.l.b16 %v126
    %v178 = vunpack.c.h.b16 %v126
    %v179 = vunpack.c.l.b16 %v127
    %v180 = vunpack.c.h.b16 %v127
    %v181 = vunpack.c.l.b16 %v128
    %v182 = vunpack.c.h.b16 %v128
    %v183 = vunpack.c.l.b16 %v129
    %v184 = vunpack.c.h.b16 %v129
    %v185 = vunpack.c.l.b16 %v130
    %v186 = vunpack.c.h.b16 %v130
    %v187 = vunpack.c.l.b16 %v131
    %v188 = vunpack.c.h.b16 %v131
    %v189 = vunpack.c.l.b16 %v132
    %v190 = vunpack.c.h.b16 %v132
    %v191 = vunpack.c.l.b16 %v133
    %v192 = vunpack.c.h.b16 %v133
    %v193 = vunpack.c.l.b16 %v134
    %v194 = vunpack.c.h.b16 %v134
    %v195 = vpack.c.b16 %v165, %v163
    %v196 = vpack.c.b16 %v166, %v164
    %v197 = vpack.c.b16 %v169, %v167
    %v198 = vpack.c.b16 %v170, %v168
    %v199 = vpack.c.b16 %v173, %v171
    %v200 = vpack.c.b16 %v174, %v172
    %v201 = vpack.c.b16 %v177, %v175
    %v202 = vpack.c.b16 %v178, %v176
    %v203 = vpack.c.b16 %v181, %v179
    %v204 = vpack.c.b16 %v182, %v180
    %v205 = vpack.c.b16 %v185, %v183
    %v206 = vpack.c.b16 %v186, %v184
    %v207 = vpack.c.b16 %v189, %v187
    %v208 = vpack.c.b16 %v190, %v188
    %v209 = vpack.c.b16 %v193, %v191
    %v210 = vpack.c.b16 %v194, %v192
    %227 = vmatpush.bf16.msra.mxu0 %v209
    %228 = vmatpush.bf16.msra.mxu0 %v207
    %229 = vmatpush.bf16.msra.mxu0 %v205
    %230 = vmatpush.bf16.msra.mxu0 %v203
    %231 = vmatpush.bf16.msra.mxu0 %v201
    %232 = vmatpush.bf16.msra.mxu0 %v199
    %233 = vmatpush.bf16.msra.mxu0 %v197
    %234 = vmatpush.bf16.msra.mxu0 %v195
    %235 = vmatmul.bf16.gmra.mxu0 %v145
    %v236 = vpop.f32.mrf.mxu0
    %v237 = vadd.f32 %v137, %v236
    %v238 = vpop.f32.mrf.mxu0
    %v239 = vadd.f32 %v137, %v238
    %240 = vdwg.mxu0
    %241 = vmatpush.bf16.msra.mxu0 %v210
    %242 = vmatpush.bf16.msra.mxu0 %v208
    %243 = vmatpush.bf16.msra.mxu0 %v206
    %244 = vmatpush.bf16.msra.mxu0 %v204
    %245 = vmatpush.bf16.msra.mxu0 %v202
    %246 = vmatpush.bf16.msra.mxu0 %v200
    %247 = vmatpush.bf16.msra.mxu0 %v198
    %248 = vmatpush.bf16.msra.mxu0 %v196
    %249 = vmatmul.bf16.gmra.mxu0 %v145
    %v250 = vpop.f32.mrf.mxu0
    %v251 = vadd.f32 %v138, %v250
    %v252 = vpop.f32.mrf.mxu0
    %v253 = vadd.f32 %v138, %v252
    %254 = vdwg.mxu0
    %v255 = vpack.c.bf16 %v239, %v237
    %v256 = vpack.c.bf16 %v253, %v251
    %v257 = vld [vmem:[#allocation8] sm:$0xff]
    %v258 = vld [vmem:[#allocation8 + $0x8] sm:$0xff]
    %v259 = vld [vmem:[#allocation8 + $0x10] sm:$0xff]
    %v260 = vld [vmem:[#allocation8 + $0x18] sm:$0xff]
    %v261 = vld [vmem:[#allocation8 + $0x20] sm:$0xff]
    %v262 = vld [vmem:[#allocation8 + $0x28] sm:$0xff]
    %v263 = vld [vmem:[#allocation8 + $0x30] sm:$0xff]
    %v264 = vld [vmem:[#allocation8 + $0x38] sm:$0xff]
    %v265 = vld [vmem:[#allocation8 + $0x40] sm:$0xff]
    %v266 = vld [vmem:[#allocation8 + $0x48] sm:$0xff]
    %v267 = vld [vmem:[#allocation8 + $0x50] sm:$0xff]
    %v268 = vld [vmem:[#allocation8 + $0x58] sm:$0xff]
    %v269 = vld [vmem:[#allocation8 + $0x60] sm:$0xff]
    %v270 = vld [vmem:[#allocation8 + $0x68] sm:$0xff]
    %v271 = vld [vmem:[#allocation8 + $0x70] sm:$0xff]
    %v272 = vld [vmem:[#allocation8 + $0x78] sm:$0xff]
    %v273 = vld [vmem:[#allocation8 + $0x80] sm:$0xff]
    %v274 = vld [vmem:[#allocation8 + $0x88] sm:$0xff]
    %v275 = vld [vmem:[#allocation8 + $0x90] sm:$0xff]
    %v276 = vld [vmem:[#allocation8 + $0x98] sm:$0xff]
    %v277 = vld [vmem:[#allocation8 + $0xa0] sm:$0xff]
    %v278 = vld [vmem:[#allocation8 + $0xa8] sm:$0xff]
    %v279 = vld [vmem:[#allocation8 + $0xb0] sm:$0xff]
    %v280 = vld [vmem:[#allocation8 + $0xb8] sm:$0xff]
    %v281 = vld [vmem:[#allocation8 + $0xc0] sm:$0xff]
    %v282 = vld [vmem:[#allocation8 + $0xc8] sm:$0xff]
    %v283 = vld [vmem:[#allocation8 + $0xd0] sm:$0xff]
    %v284 = vld [vmem:[#allocation8 + $0xd8] sm:$0xff]
    %v285 = vld [vmem:[#allocation8 + $0xe0] sm:$0xff]
    %v286 = vld [vmem:[#allocation8 + $0xe8] sm:$0xff]
    %v287 = vld [vmem:[#allocation8 + $0xf0] sm:$0xff]
    %v288 = vld [vmem:[#allocation8 + $0xf8] sm:$0xff]
    %v289 = vld [vmem:[#allocation8 + $0x100] sm:$0xff]
    %v290 = vld [vmem:[#allocation8 + $0x108] sm:$0xff]
    %v291 = vld [vmem:[#allocation8 + $0x110] sm:$0xff]
    %v292 = vld [vmem:[#allocation8 + $0x118] sm:$0xff]
    %v293 = vld [vmem:[#allocation8 + $0x120] sm:$0xff]
    %v294 = vld [vmem:[#allocation8 + $0x128] sm:$0xff]
    %v295 = vld [vmem:[#allocation8 + $0x130] sm:$0xff]
    %v296 = vld [vmem:[#allocation8 + $0x138] sm:$0xff]
    %v297 = vld [vmem:[#allocation8 + $0x140] sm:$0xff]
    %v298 = vld [vmem:[#allocation8 + $0x148] sm:$0xff]
    %v299 = vld [vmem:[#allocation8 + $0x150] sm:$0xff]
    %v300 = vld [vmem:[#allocation8 + $0x158] sm:$0xff]
    %v301 = vld [vmem:[#allocation8 + $0x160] sm:$0xff]
    %v302 = vld [vmem:[#allocation8 + $0x168] sm:$0xff]
    %v303 = vld [vmem:[#allocation8 + $0x170] sm:$0xff]
    %v304 = vld [vmem:[#allocation8 + $0x178] sm:$0xff]
    %v305 = vld [vmem:[#allocation8 + $0x180] sm:$0xff]
    %v306 = vld [vmem:[#allocation8 + $0x188] sm:$0xff]
    %v307 = vld [vmem:[#allocation8 + $0x190] sm:$0xff]
    %v308 = vld [vmem:[#allocation8 + $0x198] sm:$0xff]
    %v309 = vld [vmem:[#allocation8 + $0x1a0] sm:$0xff]
    %v310 = vld [vmem:[#allocation8 + $0x1a8] sm:$0xff]
    %v311 = vld [vmem:[#allocation8 + $0x1b0] sm:$0xff]
    %v312 = vld [vmem:[#allocation8 + $0x1b8] sm:$0xff]
    %v313 = vld [vmem:[#allocation8 + $0x1c0] sm:$0xff]
    %v314 = vld [vmem:[#allocation8 + $0x1c8] sm:$0xff]
    %v315 = vld [vmem:[#allocation8 + $0x1d0] sm:$0xff]
    %v316 = vld [vmem:[#allocation8 + $0x1d8] sm:$0xff]
    %v317 = vld [vmem:[#allocation8 + $0x1e0] sm:$0xff]
    %v318 = vld [vmem:[#allocation8 + $0x1e8] sm:$0xff]
    %v319 = vld [vmem:[#allocation8 + $0x1f0] sm:$0xff]
    %v320 = vld [vmem:[#allocation8 + $0x1f8] sm:$0xff]
    %v321 = vld [vmem:[#allocation10] sm:$0xf]
    %v323 = vperm.slane %v321, 0
    %v324 = vperm.slane %v321, 1
    %v325 = vperm.slane %v321, 2
    %v326 = vperm.slane %v321, 3
    %v395 = vunpack.c.l.b16 %v257
    %v396 = vunpack.c.h.b16 %v257
    %v397 = vunpack.c.l.b16 %v258
    %v398 = vunpack.c.h.b16 %v258
    %v399 = vunpack.c.l.b16 %v259
    %v400 = vunpack.c.h.b16 %v259
    %v401 = vunpack.c.l.b16 %v260
    %v402 = vunpack.c.h.b16 %v260
    %v403 = vunpack.c.l.b16 %v261
    %v404 = vunpack.c.h.b16 %v261
    %v405 = vunpack.c.l.b16 %v262
    %v406 = vunpack.c.h.b16 %v262
    %v407 = vunpack.c.l.b16 %v263
    %v408 = vunpack.c.h.b16 %v263
    %v409 = vunpack.c.l.b16 %v264
    %v410 = vunpack.c.h.b16 %v264
    %v411 = vunpack.c.l.b16 %v265
    %v412 = vunpack.c.h.b16 %v265
    %v413 = vunpack.c.l.b16 %v266
    %v414 = vunpack.c.h.b16 %v266
    %v415 = vunpack.c.l.b16 %v267
    %v416 = vunpack.c.h.b16 %v267
    %v417 = vunpack.c.l.b16 %v268
    %v418 = vunpack.c.h.b16 %v268
    %v419 = vunpack.c.l.b16 %v269
    %v420 = vunpack.c.h.b16 %v269
    %v421 = vunpack.c.l.b16 %v270
    %v422 = vunpack.c.h.b16 %v270
    %v423 = vunpack.c.l.b16 %v271
    %v424 = vunpack.c.h.b16 %v271
    %v425 = vunpack.c.l.b16 %v272
    %v426 = vunpack.c.h.b16 %v272
    %v427 = vunpack.c.l.b16 %v273
    %v428 = vunpack.c.h.b16 %v273
    %v429 = vunpack.c.l.b16 %v274
    %v430 = vunpack.c.h.b16 %v274
    %v431 = vunpack.c.l.b16 %v275
    %v432 = vunpack.c.h.b16 %v275
    %v433 = vunpack.c.l.b16 %v276
    %v434 = vunpack.c.h.b16 %v276
    %v435 = vunpack.c.l.b16 %v277
    %v436 = vunpack.c.h.b16 %v277
    %v437 = vunpack.c.l.b16 %v278
    %v438 = vunpack.c.h.b16 %v278
    %v439 = vunpack.c.l.b16 %v279
    %v440 = vunpack.c.h.b16 %v279
    %v441 = vunpack.c.l.b16 %v280
    %v442 = vunpack.c.h.b16 %v280
    %v443 = vunpack.c.l.b16 %v281
    %v444 = vunpack.c.h.b16 %v281
    %v445 = vunpack.c.l.b16 %v282
    %v446 = vunpack.c.h.b16 %v282
    %v447 = vunpack.c.l.b16 %v283
    %v448 = vunpack.c.h.b16 %v283
    %v449 = vunpack.c.l.b16 %v284
    %v450 = vunpack.c.h.b16 %v284
    %v451 = vunpack.c.l.b16 %v285
    %v452 = vunpack.c.h.b16 %v285
    %v453 = vunpack.c.l.b16 %v286
    %v454 = vunpack.c.h.b16 %v286
    %v455 = vunpack.c.l.b16 %v287
    %v456 = vunpack.c.h.b16 %v287
    %v457 = vunpack.c.l.b16 %v288
    %v458 = vunpack.c.h.b16 %v288
    %v459 = vunpack.c.l.b16 %v289
    %v460 = vunpack.c.h.b16 %v289
    %v461 = vunpack.c.l.b16 %v290
    %v462 = vunpack.c.h.b16 %v290
    %v463 = vunpack.c.l.b16 %v291
    %v464 = vunpack.c.h.b16 %v291
    %v465 = vunpack.c.l.b16 %v292
    %v466 = vunpack.c.h.b16 %v292
    %v467 = vunpack.c.l.b16 %v293
    %v468 = vunpack.c.h.b16 %v293
    %v469 = vunpack.c.l.b16 %v294
    %v470 = vunpack.c.h.b16 %v294
    %v471 = vunpack.c.l.b16 %v295
    %v472 = vunpack.c.h.b16 %v295
    %v473 = vunpack.c.l.b16 %v296
    %v474 = vunpack.c.h.b16 %v296
    %v475 = vunpack.c.l.b16 %v297
    %v476 = vunpack.c.h.b16 %v297
    %v477 = vunpack.c.l.b16 %v298
    %v478 = vunpack.c.h.b16 %v298
    %v479 = vunpack.c.l.b16 %v299
    %v480 = vunpack.c.h.b16 %v299
    %v481 = vunpack.c.l.b16 %v300
    %v482 = vunpack.c.h.b16 %v300
    %v483 = vunpack.c.l.b16 %v301
    %v484 = vunpack.c.h.b16 %v301
    %v485 = vunpack.c.l.b16 %v302
    %v486 = vunpack.c.h.b16 %v302
    %v487 = vunpack.c.l.b16 %v303
    %v488 = vunpack.c.h.b16 %v303
    %v489 = vunpack.c.l.b16 %v304
    %v490 = vunpack.c.h.b16 %v304
    %v491 = vunpack.c.l.b16 %v305
    %v492 = vunpack.c.h.b16 %v305
    %v493 = vunpack.c.l.b16 %v306
    %v494 = vunpack.c.h.b16 %v306
    %v495 = vunpack.c.l.b16 %v307
    %v496 = vunpack.c.h.b16 %v307
    %v497 = vunpack.c.l.b16 %v308
    %v498 = vunpack.c.h.b16 %v308
    %v499 = vunpack.c.l.b16 %v309
    %v500 = vunpack.c.h.b16 %v309
    %v501 = vunpack.c.l.b16 %v310
    %v502 = vunpack.c.h.b16 %v310
    %v503 = vunpack.c.l.b16 %v311
    %v504 = vunpack.c.h.b16 %v311
    %v505 = vunpack.c.l.b16 %v312
    %v506 = vunpack.c.h.b16 %v312
    %v507 = vunpack.c.l.b16 %v313
    %v508 = vunpack.c.h.b16 %v313
    %v509 = vunpack.c.l.b16 %v314
    %v510 = vunpack.c.h.b16 %v314
    %v511 = vunpack.c.l.b16 %v315
    %v512 = vunpack.c.h.b16 %v315
    %v513 = vunpack.c.l.b16 %v316
    %v514 = vunpack.c.h.b16 %v316
    %v515 = vunpack.c.l.b16 %v317
    %v516 = vunpack.c.h.b16 %v317
    %v517 = vunpack.c.l.b16 %v318
    %v518 = vunpack.c.h.b16 %v318
    %v519 = vunpack.c.l.b16 %v319
    %v520 = vunpack.c.h.b16 %v319
    %v521 = vunpack.c.l.b16 %v320
    %v522 = vunpack.c.h.b16 %v320
    %v523 = vpack.c.b16 %v399, %v395
    %v524 = vpack.c.b16 %v400, %v396
    %v525 = vpack.c.b16 %v401, %v397
    %v526 = vpack.c.b16 %v402, %v398
    %v527 = vpack.c.b16 %v407, %v403
    %v528 = vpack.c.b16 %v408, %v404
    %v529 = vpack.c.b16 %v409, %v405
    %v530 = vpack.c.b16 %v410, %v406
    %v531 = vpack.c.b16 %v415, %v411
    %v532 = vpack.c.b16 %v416, %v412
    %v533 = vpack.c.b16 %v417, %v413
    %v534 = vpack.c.b16 %v418, %v414
    %v535 = vpack.c.b16 %v423, %v419
    %v536 = vpack.c.b16 %v424, %v420
    %v537 = vpack.c.b16 %v425, %v421
    %v538 = vpack.c.b16 %v426, %v422
    %v539 = vpack.c.b16 %v431, %v427
    %v540 = vpack.c.b16 %v432, %v428
    %v541 = vpack.c.b16 %v433, %v429
    %v542 = vpack.c.b16 %v434, %v430
    %v543 = vpack.c.b16 %v439, %v435
    %v544 = vpack.c.b16 %v440, %v436
    %v545 = vpack.c.b16 %v441, %v437
    %v546 = vpack.c.b16 %v442, %v438
    %v547 = vpack.c.b16 %v447, %v443
    %v548 = vpack.c.b16 %v448, %v444
    %v549 = vpack.c.b16 %v449, %v445
    %v550 = vpack.c.b16 %v450, %v446
    %v551 = vpack.c.b16 %v455, %v451
    %v552 = vpack.c.b16 %v456, %v452
    %v553 = vpack.c.b16 %v457, %v453
    %v554 = vpack.c.b16 %v458, %v454
    %v555 = vpack.c.b16 %v463, %v459
    %v556 = vpack.c.b16 %v464, %v460
    %v557 = vpack.c.b16 %v465, %v461
    %v558 = vpack.c.b16 %v466, %v462
    %v559 = vpack.c.b16 %v471, %v467
    %v560 = vpack.c.b16 %v472, %v468
    %v561 = vpack.c.b16 %v473, %v469
    %v562 = vpack.c.b16 %v474, %v470
    %v563 = vpack.c.b16 %v479, %v475
    %v564 = vpack.c.b16 %v480, %v476
    %v565 = vpack.c.b16 %v481, %v477
    %v566 = vpack.c.b16 %v482, %v478
    %v567 = vpack.c.b16 %v487, %v483
    %v568 = vpack.c.b16 %v488, %v484
    %v569 = vpack.c.b16 %v489, %v485
    %v570 = vpack.c.b16 %v490, %v486
    %v571 = vpack.c.b16 %v495, %v491
    %v572 = vpack.c.b16 %v496, %v492
    %v573 = vpack.c.b16 %v497, %v493
    %v574 = vpack.c.b16 %v498, %v494
    %v575 = vpack.c.b16 %v503, %v499
    %v576 = vpack.c.b16 %v504, %v500
    %v577 = vpack.c.b16 %v505, %v501
    %v578 = vpack.c.b16 %v506, %v502
    %v579 = vpack.c.b16 %v511, %v507
    %v580 = vpack.c.b16 %v512, %v508
    %v581 = vpack.c.b16 %v513, %v509
    %v582 = vpack.c.b16 %v514, %v510
    %v583 = vpack.c.b16 %v519, %v515
    %v584 = vpack.c.b16 %v520, %v516
    %v585 = vpack.c.b16 %v521, %v517
    %v586 = vpack.c.b16 %v522, %v518
    %651 = vmatpush.bf16.msra.mxu0 %v551
    %652 = vmatpush.bf16.msra.mxu0 %v547
    %653 = vmatpush.bf16.msra.mxu0 %v543
    %654 = vmatpush.bf16.msra.mxu0 %v539
    %655 = vmatpush.bf16.msra.mxu0 %v535
    %656 = vmatpush.bf16.msra.mxu0 %v531
    %657 = vmatpush.bf16.msra.mxu0 %v527
    %658 = vmatpush.bf16.msra.mxu0 %v523
    %659 = vmatmul.bf16.gmra.mxu0 %v255
    %v660 = vpop.f32.mrf.mxu0
    %v661 = vadd.f32 %v323, %v660
    %v662 = vpop.f32.mrf.mxu0
    %v663 = vadd.f32 %v323, %v662
    %664 = vdwg.mxu0
    %665 = vmatpush.bf16.msra.mxu0 %v583
    %666 = vmatpush.bf16.msra.mxu0 %v579
    %667 = vmatpush.bf16.msra.mxu0 %v575
    %668 = vmatpush.bf16.msra.mxu0 %v571
    %669 = vmatpush.bf16.msra.mxu0 %v567
    %670 = vmatpush.bf16.msra.mxu0 %v563
    %671 = vmatpush.bf16.msra.mxu0 %v559
    %672 = vmatpush.bf16.msra.mxu0 %v555
    %673 = vmatmul.bf16.gmra.mxu0 %v256
    %v674 = vpop.f32.mrf.mxu0
    %v675 = vadd.f32 %v661, %v674
    %v676 = vpop.f32.mrf.mxu0
    %v677 = vadd.f32 %v663, %v676
    %678 = vdwg.mxu0
    %679 = vmatpush.bf16.msra.mxu0 %v552
    %680 = vmatpush.bf16.msra.mxu0 %v548
    %681 = vmatpush.bf16.msra.mxu0 %v544
    %682 = vmatpush.bf16.msra.mxu0 %v540
    %683 = vmatpush.bf16.msra.mxu0 %v536
    %684 = vmatpush.bf16.msra.mxu0 %v532
    %685 = vmatpush.bf16.msra.mxu0 %v528
    %686 = vmatpush.bf16.msra.mxu0 %v524
    %687 = vmatmul.bf16.gmra.mxu0 %v255
    %v688 = vpop.f32.mrf.mxu0
    %v689 = vadd.f32 %v324, %v688
    %v690 = vpop.f32.mrf.mxu0
    %v691 = vadd.f32 %v324, %v690
    %692 = vdwg.mxu0
    %693 = vmatpush.bf16.msra.mxu0 %v584
    %694 = vmatpush.bf16.msra.mxu0 %v580
    %695 = vmatpush.bf16.msra.mxu0 %v576
    %696 = vmatpush.bf16.msra.mxu0 %v572
    %697 = vmatpush.bf16.msra.mxu0 %v568
    %698 = vmatpush.bf16.msra.mxu0 %v564
    %699 = vmatpush.bf16.msra.mxu0 %v560
    %700 = vmatpush.bf16.msra.mxu0 %v556
    %701 = vmatmul.bf16.gmra.mxu0 %v256
    %v702 = vpop.f32.mrf.mxu0
    %v703 = vadd.f32 %v689, %v702
    %v704 = vpop.f32.mrf.mxu0
    %v705 = vadd.f32 %v691, %v704
    %706 = vdwg.mxu0
    %707 = vmatpush.bf16.msra.mxu0 %v553
    %708 = vmatpush.bf16.msra.mxu0 %v549
    %709 = vmatpush.bf16.msra.mxu0 %v545
    %710 = vmatpush.bf16.msra.mxu0 %v541
    %711 = vmatpush.bf16.msra.mxu0 %v537
    %712 = vmatpush.bf16.msra.mxu0 %v533
    %713 = vmatpush.bf16.msra.mxu0 %v529
    %714 = vmatpush.bf16.msra.mxu0 %v525
    %715 = vmatmul.bf16.gmra.mxu0 %v255
    %v716 = vpop.f32.mrf.mxu0
    %v717 = vadd.f32 %v325, %v716
    %v718 = vpop.f32.mrf.mxu0
    %v719 = vadd.f32 %v325, %v718
    %720 = vdwg.mxu0
    %721 = vmatpush.bf16.msra.mxu0 %v585
    %722 = vmatpush.bf16.msra.mxu0 %v581
    %723 = vmatpush.bf16.msra.mxu0 %v577
    %724 = vmatpush.bf16.msra.mxu0 %v573
    %725 = vmatpush.bf16.msra.mxu0 %v569
    %726 = vmatpush.bf16.msra.mxu0 %v565
    %727 = vmatpush.bf16.msra.mxu0 %v561
    %728 = vmatpush.bf16.msra.mxu0 %v557
    %729 = vmatmul.bf16.gmra.mxu0 %v256
    %v730 = vpop.f32.mrf.mxu0
    %v731 = vadd.f32 %v717, %v730
    %v732 = vpop.f32.mrf.mxu0
    %v733 = vadd.f32 %v719, %v732
    %734 = vdwg.mxu0
    %735 = vmatpush.bf16.msra.mxu0 %v554
    %736 = vmatpush.bf16.msra.mxu0 %v550
    %737 = vmatpush.bf16.msra.mxu0 %v546
    %738 = vmatpush.bf16.msra.mxu0 %v542
    %739 = vmatpush.bf16.msra.mxu0 %v538
    %740 = vmatpush.bf16.msra.mxu0 %v534
    %741 = vmatpush.bf16.msra.mxu0 %v530
    %742 = vmatpush.bf16.msra.mxu0 %v526
    %743 = vmatmul.bf16.gmra.mxu0 %v255
    %v744 = vpop.f32.mrf.mxu0
    %v745 = vadd.f32 %v326, %v744
    %v746 = vpop.f32.mrf.mxu0
    %v747 = vadd.f32 %v326, %v746
    %748 = vdwg.mxu0
    %749 = vmatpush.bf16.msra.mxu0 %v586
    %750 = vmatpush.bf16.msra.mxu0 %v582
    %751 = vmatpush.bf16.msra.mxu0 %v578
    %752 = vmatpush.bf16.msra.mxu0 %v574
    %753 = vmatpush.bf16.msra.mxu0 %v570
    %754 = vmatpush.bf16.msra.mxu0 %v566
    %755 = vmatpush.bf16.msra.mxu0 %v562
    %756 = vmatpush.bf16.msra.mxu0 %v558
    %757 = vmatmul.bf16.gmra.mxu0 %v256
    %v758 = vpop.f32.mrf.mxu0
    %v759 = vadd.f32 %v745, %v758
    %v760 = vpop.f32.mrf.mxu0
    %v761 = vadd.f32 %v747, %v760
    %762 = vdwg.mxu0
    %v763 = vpack.c.bf16 %v677, %v675
    %v764 = vpack.c.bf16 %v705, %v703
    %v765 = vpack.c.bf16 %v733, %v731
    %v766 = vpack.c.bf16 %v761, %v759
    %v767 = vld [vmem:[#allocation11] sm:$0xf]
    %v768 = vld [vmem:[#allocation11 + $0x4] sm:$0xf]
    %v769 = vld [vmem:[#allocation11 + $0x8] sm:$0xf]
    %v770 = vld [vmem:[#allocation11 + $0xc] sm:$0xf]
    %v771 = vld [vmem:[#allocation11 + $0x10] sm:$0xf]
    %v772 = vld [vmem:[#allocation11 + $0x14] sm:$0xf]
    %v773 = vld [vmem:[#allocation11 + $0x18] sm:$0xf]
    %v774 = vld [vmem:[#allocation11 + $0x1c] sm:$0xf]
    %v775 = vld [vmem:[#allocation11 + $0x20] sm:$0xf]
    %v776 = vld [vmem:[#allocation11 + $0x24] sm:$0xf]
    %v777 = vld [vmem:[#allocation11 + $0x28] sm:$0xf]
    %v778 = vld [vmem:[#allocation11 + $0x2c] sm:$0xf]
    %v779 = vld [vmem:[#allocation11 + $0x30] sm:$0xf]
    %v780 = vld [vmem:[#allocation11 + $0x34] sm:$0xf]
    %v781 = vld [vmem:[#allocation11 + $0x38] sm:$0xf]
    %v782 = vld [vmem:[#allocation11 + $0x3c] sm:$0xf]
    %v783 = vld [vmem:[#allocation11 + $0x40] sm:$0xf]
    %v784 = vld [vmem:[#allocation11 + $0x44] sm:$0xf]
    %v785 = vld [vmem:[#allocation11 + $0x48] sm:$0xf]
    %v786 = vld [vmem:[#allocation11 + $0x4c] sm:$0xf]
    %v787 = vld [vmem:[#allocation11 + $0x50] sm:$0xf]
    %v788 = vld [vmem:[#allocation11 + $0x54] sm:$0xf]
    %v789 = vld [vmem:[#allocation11 + $0x58] sm:$0xf]
    %v790 = vld [vmem:[#allocation11 + $0x5c] sm:$0xf]
    %v791 = vld [vmem:[#allocation11 + $0x60] sm:$0xf]
    %v792 = vld [vmem:[#allocation11 + $0x64] sm:$0xf]
    %v793 = vld [vmem:[#allocation11 + $0x68] sm:$0xf]
    %v794 = vld [vmem:[#allocation11 + $0x6c] sm:$0xf]
    %v795 = vld [vmem:[#allocation11 + $0x70] sm:$0xf]
    %v796 = vld [vmem:[#allocation11 + $0x74] sm:$0xf]
    %v797 = vld [vmem:[#allocation11 + $0x78] sm:$0xf]
    %v798 = vld [vmem:[#allocation11 + $0x7c] sm:$0xf]
    %v799 = vld [vmem:[#allocation11 + $0x80] sm:$0xf]
    %v800 = vld [vmem:[#allocation11 + $0x84] sm:$0xf]
    %v801 = vld [vmem:[#allocation11 + $0x88] sm:$0xf]
    %v802 = vld [vmem:[#allocation11 + $0x8c] sm:$0xf]
    %v803 = vld [vmem:[#allocation11 + $0x90] sm:$0xf]
    %v804 = vld [vmem:[#allocation11 + $0x94] sm:$0xf]
    %v805 = vld [vmem:[#allocation11 + $0x98] sm:$0xf]
    %v806 = vld [vmem:[#allocation11 + $0x9c] sm:$0xf]
    %v807 = vld [vmem:[#allocation11 + $0xa0] sm:$0xf]
    %v808 = vld [vmem:[#allocation11 + $0xa4] sm:$0xf]
    %v809 = vld [vmem:[#allocation11 + $0xa8] sm:$0xf]
    %v810 = vld [vmem:[#allocation11 + $0xac] sm:$0xf]
    %v811 = vld [vmem:[#allocation11 + $0xb0] sm:$0xf]
    %v812 = vld [vmem:[#allocation11 + $0xb4] sm:$0xf]
    %v813 = vld [vmem:[#allocation11 + $0xb8] sm:$0xf]
    %v814 = vld [vmem:[#allocation11 + $0xbc] sm:$0xf]
    %v815 = vld [vmem:[#allocation11 + $0xc0] sm:$0xf]
    %v816 = vld [vmem:[#allocation11 + $0xc4] sm:$0xf]
    %v817 = vld [vmem:[#allocation11 + $0xc8] sm:$0xf]
    %v818 = vld [vmem:[#allocation11 + $0xcc] sm:$0xf]
    %v819 = vld [vmem:[#allocation11 + $0xd0] sm:$0xf]
    %v820 = vld [vmem:[#allocation11 + $0xd4] sm:$0xf]
    %v821 = vld [vmem:[#allocation11 + $0xd8] sm:$0xf]
    %v822 = vld [vmem:[#allocation11 + $0xdc] sm:$0xf]
    %v823 = vld [vmem:[#allocation11 + $0xe0] sm:$0xf]
    %v824 = vld [vmem:[#allocation11 + $0xe4] sm:$0xf]
    %v825 = vld [vmem:[#allocation11 + $0xe8] sm:$0xf]
    %v826 = vld [vmem:[#allocation11 + $0xec] sm:$0xf]
    %v827 = vld [vmem:[#allocation11 + $0xf0] sm:$0xf]
    %v828 = vld [vmem:[#allocation11 + $0xf4] sm:$0xf]
    %v829 = vld [vmem:[#allocation11 + $0xf8] sm:$0xf]
    %v830 = vld [vmem:[#allocation11 + $0xfc] sm:$0xf]
    %v831 = vld [vmem:[%s6] sm:$0x1]
    %v833 = vperm.slane %v831, 0
    %v899 = vunpack.c.l.b16 %v767
    %v900 = vunpack.c.l.b16 %v768
    %v901 = vunpack.c.l.b16 %v769
    %v902 = vunpack.c.l.b16 %v770
    %v903 = vunpack.c.l.b16 %v771
    %v904 = vunpack.c.l.b16 %v772
    %v905 = vunpack.c.l.b16 %v773
    %v906 = vunpack.c.l.b16 %v774
    %v907 = vunpack.c.l.b16 %v775
    %v908 = vunpack.c.l.b16 %v776
    %v909 = vunpack.c.l.b16 %v777
    %v910 = vunpack.c.l.b16 %v778
    %v911 = vunpack.c.l.b16 %v779
    %v912 = vunpack.c.l.b16 %v780
    %v913 = vunpack.c.l.b16 %v781
    %v914 = vunpack.c.l.b16 %v782
    %v915 = vunpack.c.l.b16 %v783
    %v916 = vunpack.c.l.b16 %v784
    %v917 = vunpack.c.l.b16 %v785
    %v918 = vunpack.c.l.b16 %v786
    %v919 = vunpack.c.l.b16 %v787
    %v920 = vunpack.c.l.b16 %v788
    %v921 = vunpack.c.l.b16 %v789
    %v922 = vunpack.c.l.b16 %v790
    %v923 = vunpack.c.l.b16 %v791
    %v924 = vunpack.c.l.b16 %v792
    %v925 = vunpack.c.l.b16 %v793
    %v926 = vunpack.c.l.b16 %v794
    %v927 = vunpack.c.l.b16 %v795
    %v928 = vunpack.c.l.b16 %v796
    %v929 = vunpack.c.l.b16 %v797
    %v930 = vunpack.c.l.b16 %v798
    %v931 = vunpack.c.l.b16 %v799
    %v932 = vunpack.c.l.b16 %v800
    %v933 = vunpack.c.l.b16 %v801
    %v934 = vunpack.c.l.b16 %v802
    %v935 = vunpack.c.l.b16 %v803
    %v936 = vunpack.c.l.b16 %v804
    %v937 = vunpack.c.l.b16 %v805
    %v938 = vunpack.c.l.b16 %v806
    %v939 = vunpack.c.l.b16 %v807
    %v940 = vunpack.c.l.b16 %v808
    %v941 = vunpack.c.l.b16 %v809
    %v942 = vunpack.c.l.b16 %v810
    %v943 = vunpack.c.l.b16 %v811
    %v944 = vunpack.c.l.b16 %v812
    %v945 = vunpack.c.l.b16 %v813
    %v946 = vunpack.c.l.b16 %v814
    %v947 = vunpack.c.l.b16 %v815
    %v948 = vunpack.c.l.b16 %v816
    %v949 = vunpack.c.l.b16 %v817
    %v950 = vunpack.c.l.b16 %v818
    %v951 = vunpack.c.l.b16 %v819
    %v952 = vunpack.c.l.b16 %v820
    %v953 = vunpack.c.l.b16 %v821
    %v954 = vunpack.c.l.b16 %v822
    %v955 = vunpack.c.l.b16 %v823
    %v956 = vunpack.c.l.b16 %v824
    %v957 = vunpack.c.l.b16 %v825
    %v958 = vunpack.c.l.b16 %v826
    %v959 = vunpack.c.l.b16 %v827
    %v960 = vunpack.c.l.b16 %v828
    %v961 = vunpack.c.l.b16 %v829
    %v962 = vunpack.c.l.b16 %v830
    %v963 = vpack.c.b16 %v900, %v899
    %v964 = vpack.c.b16 %v902, %v901
    %v965 = vpack.c.b16 %v904, %v903
    %v966 = vpack.c.b16 %v906, %v905
    %v967 = vpack.c.b16 %v908, %v907
    %v968 = vpack.c.b16 %v910, %v909
    %v969 = vpack.c.b16 %v912, %v911
    %v970 = vpack.c.b16 %v914, %v913
    %v971 = vpack.c.b16 %v916, %v915
    %v972 = vpack.c.b16 %v918, %v917
    %v973 = vpack.c.b16 %v920, %v919
    %v974 = vpack.c.b16 %v922, %v921
    %v975 = vpack.c.b16 %v924, %v923
    %v976 = vpack.c.b16 %v926, %v925
    %v977 = vpack.c.b16 %v928, %v927
    %v978 = vpack.c.b16 %v930, %v929
    %v979 = vpack.c.b16 %v932, %v931
    %v980 = vpack.c.b16 %v934, %v933
    %v981 = vpack.c.b16 %v936, %v935
    %v982 = vpack.c.b16 %v938, %v937
    %v983 = vpack.c.b16 %v940, %v939
    %v984 = vpack.c.b16 %v942, %v941
    %v985 = vpack.c.b16 %v944, %v943
    %v986 = vpack.c.b16 %v946, %v945
    %v987 = vpack.c.b16 %v948, %v947
    %v988 = vpack.c.b16 %v950, %v949
    %v989 = vpack.c.b16 %v952, %v951
    %v990 = vpack.c.b16 %v954, %v953
    %v991 = vpack.c.b16 %v956, %v955
    %v992 = vpack.c.b16 %v958, %v957
    %v993 = vpack.c.b16 %v960, %v959
    %v994 = vpack.c.b16 %v962, %v961
    %1027 = vmatpush.bf16.msra.mxu0 %v970
    %1028 = vmatpush.bf16.msra.mxu0 %v969
    %1029 = vmatpush.bf16.msra.mxu0 %v968
    %1030 = vmatpush.bf16.msra.mxu0 %v967
    %1031 = vmatpush.bf16.msra.mxu0 %v966
    %1032 = vmatpush.bf16.msra.mxu0 %v965
    %1033 = vmatpush.bf16.msra.mxu0 %v964
    %1034 = vmatpush.bf16.msra.mxu0 %v963
    %1035 = vmatmul.bf16.gmra.mxu0 %v763
    %v1036 = vpop.f32.mrf.mxu0
    %v1037 = vadd.f32 %v833, %v1036
    %v1038 = vpop.f32.mrf.mxu0
    %v1039 = vadd.f32 %v833, %v1038
    %1040 = vdwg.mxu0
    %1041 = vmatpush.bf16.msra.mxu0 %v978
    %1042 = vmatpush.bf16.msra.mxu0 %v977
    %1043 = vmatpush.bf16.msra.mxu0 %v976
    %1044 = vmatpush.bf16.msra.mxu0 %v975
    %1045 = vmatpush.bf16.msra.mxu0 %v974
    %1046 = vmatpush.bf16.msra.mxu0 %v973
    %1047 = vmatpush.bf16.msra.mxu0 %v972
    %1048 = vmatpush.bf16.msra.mxu0 %v971
    %1049 = vmatmul.bf16.gmra.mxu0 %v764
    %v1050 = vpop.f32.mrf.mxu0
    %v1051 = vadd.f32 %v1037, %v1050
    %v1052 = vpop.f32.mrf.mxu0
    %v1053 = vadd.f32 %v1039, %v1052
    %1054 = vdwg.mxu0
    %1055 = vmatpush.bf16.msra.mxu0 %v986
    %1056 = vmatpush.bf16.msra.mxu0 %v985
    %1057 = vmatpush.bf16.msra.mxu0 %v984
    %1058 = vmatpush.bf16.msra.mxu0 %v983
    %1059 = vmatpush.bf16.msra.mxu0 %v982
    %1060 = vmatpush.bf16.msra.mxu0 %v981
    %1061 = vmatpush.bf16.msra.mxu0 %v980
    %1062 = vmatpush.bf16.msra.mxu0 %v979
    %1063 = vmatmul.bf16.gmra.mxu0 %v765
    %v1064 = vpop.f32.mrf.mxu0
    %v1065 = vadd.f32 %v1051, %v1064
    %v1066 = vpop.f32.mrf.mxu0
    %v1067 = vadd.f32 %v1053, %v1066
    %1068 = vdwg.mxu0
    %1069 = vmatpush.bf16.msra.mxu0 %v994
    %1070 = vmatpush.bf16.msra.mxu0 %v993
    %1071 = vmatpush.bf16.msra.mxu0 %v992
    %1072 = vmatpush.bf16.msra.mxu0 %v991
    %1073 = vmatpush.bf16.msra.mxu0 %v990
    %1074 = vmatpush.bf16.msra.mxu0 %v989
    %1075 = vmatpush.bf16.msra.mxu0 %v988
    %1076 = vmatpush.bf16.msra.mxu0 %v987
    %1077 = vmatmul.bf16.gmra.mxu0 %v766
    %v1078 = vpop.f32.mrf.mxu0
    %v1079 = vadd.f32 %v1065, %v1078
    %v1080 = vpop.f32.mrf.mxu0
    %v1081 = vadd.f32 %v1067, %v1080
    %1082 = vdwg.mxu0
    %1083 = vst [vmem:[#allocation13] sm:$0xff] %v1079
    %1084 = vst [vmem:[#allocation13 + $0x8] sm:$0xff] %v1081
    // Predicated region
    $region54: #{tpu_custom_call.1} parent=1 // pred_check
      _
    $region55: #{tpu_custom_call.1} parent=1 // pred_check_branch
      %1086 = sbr.rel (0) target = $region57
    $region56: #{tpu_custom_call.1} parent=1 // pred_region
      %1088 = vsyncadd [#allocation4], 0
      %s1089 = sshll.u32 [#allocation13], 4
      %s1090 = int_to_ptr.vmem [resolvable:$true] %s1089
      %s1091 = sshll.u32 %s7, 4
      %s1092 = int_to_ptr.hbm [resolvable:$true] %s1091
      %1097 = dma.vmem_to_hbm [thread:$0]  %s1090, 256, %s1092, [#allocation4], 128, 128, 8
    $region57: #{tpu_custom_call.1} parent=1 // pred_fallthru
      _
    // Predicated region
    $region58: #{tpu_custom_call.1} parent=1 // pred_check
      _
    $region59: #{tpu_custom_call.1} parent=1 // pred_check_branch
      %1099 = sbr.rel (0) target = $region61
    $region60: #{tpu_custom_call.1} parent=1 // pred_region
      %1101 = dma.done [#allocation4], 256
    $region61: #{tpu_custom_call.1} parent=1 // pred_fallthru
      _
    %1102 = vsyncpa [#allocation3], 1
    %1103 = vsyncpa [#allocation6], 1
    %1104 = vsyncpa [#allocation9], 1
    %1105 = vsyncpa [#allocation12], 1
    %1106 = vsyncpa [#allocation4], 1

</llo_original>
